<compile_context>
chip_gen: v7x
topology: tpu7x:2x2x1
jax: 0.10.0
libtpu: 0.0.40
codegen_flags: <defaults>
</compile_context>

<pallas_src>
import functools

import jax
import jax.numpy as jnp
from jax.experimental import pallas as pl
from jax.experimental.pallas import tpu as pltpu


HIDDEN = 256          # module's fixed hidden_size
A_PAD = 128           # lane-dense padded output width (action_space <= 128)
ROW_TILE = 256        # row tile for the gridded (large-batch) path
GRID_THRESHOLD = 512  # up to here, single-shot (no grid) is cheapest


def _round_up(n, m):
    return ((n + m - 1) // m) * m


# ----------------------------------------------------------------------------
# Fused Pallas kernel: out = (x @ W1 + b1) @ W2 + b2
# ----------------------------------------------------------------------------
def _backward_net_kernel(x_ref, w1_ref, b1_ref, w2_ref, b2_ref, o_ref):
    # x_ref  : (tm, K_pad)  bf16
    # w1_ref : (K_pad, H)   bf16   (pre-transposed, K zero-padded)
    # b1_ref : (1, H)       f32
    # w2_ref : (H, A_pad)   bf16   (pre-transposed, A zero-padded)
    # b2_ref : (1, A_pad)   f32    (A zero-padded)
    # o_ref  : (tm, A_pad)  f32
    #
    # l1: bf16 x bf16 MXU contraction, f32 accumulation; bias add stays f32.
    h = jnp.dot(x_ref[...], w1_ref[...], preferred_element_type=jnp.float32)
    h = h + b1_ref[...]
    # l2: narrow hidden to bf16 for a single-pass MXU feed, accumulate in f32.
    y = jnp.dot(h.astype(jnp.bfloat16), w2_ref[...],
                preferred_element_type=jnp.float32)
    o_ref[...] = (y + b2_ref[...]).astype(o_ref.dtype)


@functools.partial(jax.jit, static_argnames=("action_space",))
def backward_network_forward(x, w1_t, b1, w2_t, b2, *, action_space):
    """Fused l2(l1(x)).  Weights arrive kernel-ready (bf16, transposed, padded).

    x      : (M, 2*num_features) float32
    w1_t   : (K_pad, hidden)     bfloat16
    b1     : (1, hidden)         float32
    w2_t   : (hidden, A_pad)     bfloat16
    b2     : (1, A_pad)          float32
    returns: (M, action_space)   float32
    """
    M, K = x.shape
    K_pad, H = w1_t.shape
    H2, A_pad = w2_t.shape
    assert H == H2 and K <= K_pad and action_space <= A_pad

    # Zero-pad the contraction dim to a lane multiple and narrow x to bf16
    # (x is tiny; the DMA win is on W1, the bf16 cast buys the single-pass
    # bf16 MXU contraction).  Fuses with surrounding XLA under jit.
    x_p = jnp.pad(x.astype(jnp.bfloat16), ((0, 0), (0, K_pad - K)))

    cost = pl.CostEstimate(
        flops=2 * M * (K_pad * H + H * A_pad),
        transcendentals=0,
        bytes_accessed=(x_p.size * 2 + w1_t.size * 2 + w2_t.size * 2
                        + b1.size * 4 + b2.size * 4 + M * A_pad * 4),
    )

    if M <= GRID_THRESHOLD:
        # Single-shot: all operands (<~0.5 MiB) live whole in VMEM; the hidden
        # activation never leaves vregs/VMEM; one launch, no grid overhead.
        vmem = pl.BlockSpec(memory_space=pltpu.MemorySpace.VMEM)
        out = pl.pallas_call(
            _backward_net_kernel,
            out_shape=jax.ShapeDtypeStruct((M, A_pad), jnp.float32),
            in_specs=[vmem] * 5,
            out_specs=vmem,
            cost_estimate=cost,
        )(x_p, w1_t, b1, w2_t, b2)
    else:
        # Large batch: 1-D row grid; constant index_map keeps the weights
        # VMEM-resident (DMA'd once), and "parallel" lets v7x's two
        # TensorCores split the row tiles.
        M_pad = _round_up(M, ROW_TILE)
        if M_pad != M:
            x_p = jnp.pad(x_p, ((0, M_pad - M), (0, 0)))
        out = pl.pallas_call(
            _backward_net_kernel,
            out_shape=jax.ShapeDtypeStruct((M_pad, A_pad), jnp.float32),
            grid=(M_pad // ROW_TILE,),
            in_specs=[
                pl.BlockSpec((ROW_TILE, K_pad), lambda i: (i, 0)),
                pl.BlockSpec((K_pad, H), lambda i: (0, 0)),
                pl.BlockSpec((1, H), lambda i: (0, 0)),
                pl.BlockSpec((H, A_pad), lambda i: (0, 0)),
                pl.BlockSpec((1, A_pad), lambda i: (0, 0)),
            ],
            out_specs=pl.BlockSpec((ROW_TILE, A_pad), lambda i: (i, 0)),
            cost_estimate=cost,
            compiler_params=pltpu.CompilerParams(
                dimension_semantics=("parallel",)),
        )(x_p, w1_t, b1, w2_t, b2)
        out = out[:M]

    # Drop the zero-padded action lanes (kernel stores lane-dense, wrapper
    # returns the slim result).
    return out[:, :action_space]


# ----------------------------------------------------------------------------
# Model wrapper (parameters initialized like PyTorch nn.Linear defaults)
# ----------------------------------------------------------------------------
class BackwardNetworkPallas:
    # TODO(synk): the reference module omits super().__init__() (would crash in
    # PyTorch on attribute assignment); we implement the intended forward
    # l2(l1(x)) of the two Linear layers.
    def __init__(self, action_space, num_features=288, key=None):
        self.action_space = action_space
        self.num_features = num_features
        self.hidden_size = HIDDEN

        if key is None:
            key = jax.random.PRNGKey(0)
        k1, k2, k3, k4 = jax.random.split(key, 4)

        def uniform(k, shape, bound):
            return jax.random.uniform(k, shape, jnp.float32, -bound, bound)

        in1 = num_features * 2
        self.k_in = in1
        self.k_pad = _round_up(in1, 128)   # 576 -> 640
        self.a_pad = A_PAD
        assert action_space <= self.a_pad

        # nn.Linear default init: U(-1/sqrt(fan_in), 1/sqrt(fan_in)).
        bound1 = 1.0 / (in1 ** 0.5)
        w1_t_f32 = uniform(k1, (in1, self.hidden_size), bound1)        # (in, out)
        b1_f32 = uniform(k2, (self.hidden_size,), bound1)

        bound2 = 1.0 / (self.hidden_size ** 0.5)
        w2_t_f32 = uniform(k3, (self.hidden_size, action_space), bound2)
        b2_f32 = uniform(k4, (action_space,), bound2)

        # Keep un-padded f32 copies for reference / testing.
        self.w1_t_f32, self.b1_f32 = w1_t_f32, b1_f32
        self.w2_t_f32, self.b2_f32 = w2_t_f32, b2_f32

        # Kernel-ready parameters, prepared ONCE at init:
        #  - weights: pre-transposed (in, out), zero-padded, bf16
        #  - biases: f32, (1, N), zero-padded to lane-dense widths
        self.w1_t = jnp.pad(
            w1_t_f32, ((0, self.k_pad - in1), (0, 0))).astype(jnp.bfloat16)
        self.b1 = b1_f32.reshape(1, self.hidden_size)
        self.w2_t = jnp.pad(
            w2_t_f32, ((0, 0), (0, self.a_pad - action_space))
        ).astype(jnp.bfloat16)
        self.b2 = jnp.pad(
            b2_f32, (0, self.a_pad - action_space)).reshape(1, self.a_pad)

    def __call__(self, x):
        return backward_network_forward(
            x, self.w1_t, self.b1, self.w2_t, self.b2,
            action_space=self.action_space)


if __name__ == "__main__":
    action_space = 6
    num_features = 288          # module default
    batch = 2

    key = jax.random.PRNGKey(0)
    k_param, k_input = jax.random.split(key)

    model = BackwardNetworkPallas(action_space, num_features, key=k_param)
    x = jax.random.normal(k_input, (batch, num_features * 2), jnp.float32)

    out = model(x)
    jax.block_until_ready(out)
    assert out.shape == (batch, action_space)

    # (1) Tight check against a reference with IDENTICAL numerics (same bf16
    #     casts / zero-padding, f32 accumulation) — catches real regressions.
    x_p = jnp.pad(x.astype(jnp.bfloat16), ((0, 0), (0, model.k_pad - x.shape[1])))
    h = jnp.dot(x_p, model.w1_t, preferred_element_type=jnp.float32) + model.b1
    y = jnp.dot(h.astype(jnp.bfloat16), model.w2_t,
                preferred_element_type=jnp.float32) + model.b2
    ref_match = y[:, :action_space]
    assert jnp.allclose(out, ref_match, atol=1e-4, rtol=1e-4)

    # (2) Loose sanity check against the full-f32 math — bounds the bf16
    #     weight-quantization error only.
    ref_f32 = (x @ model.w1_t_f32 + model.b1_f32) @ model.w2_t_f32 + model.b2_f32
    assert jnp.allclose(out, ref_f32, atol=3e-2, rtol=3e-2)

    print("KERNEL_OK")
</pallas_src>

<mosaic_0001>
module attributes {stable_mosaic.version = 11 : i64} {
  func.func @_backward_net_kernel(%arg0: memref<2x640xbf16, #tpu.memory_space<vmem>>, %arg1: memref<640x256xbf16, #tpu.memory_space<vmem>>, %arg2: memref<1x256xf32, #tpu.memory_space<vmem>>, %arg3: memref<256x128xbf16, #tpu.memory_space<vmem>>, %arg4: memref<1x128xf32, #tpu.memory_space<vmem>>, %arg5: memref<2x128xf32, #tpu.memory_space<vmem>>) attributes {dimension_semantics = [], scalar_prefetch = 0 : i64, scratch_operands = 0 : i64, tpu.core_type = #tpu.core_type<tc>} {
    %c0 = arith.constant 0 : index
    %c0_0 = arith.constant 0 : index
    %0 = vector.load %arg0[%c0, %c0_0] : memref<2x640xbf16, #tpu.memory_space<vmem>>, vector<2x640xbf16>
    %c0_1 = arith.constant 0 : index
    %c0_2 = arith.constant 0 : index
    %1 = vector.load %arg1[%c0_1, %c0_2] : memref<640x256xbf16, #tpu.memory_space<vmem>>, vector<640x256xbf16>
    %cst = arith.constant dense<0.000000e+00> : vector<2x256xf32>
    %2 = tpu.matmul %0, %1, %cst {dimension_numbers = #tpu.dot_dimension_numbers<[1], [0], [0], [1], [0, 0, 1, 1], [], []>} : vector<2x640xbf16>, vector<640x256xbf16>, vector<2x256xf32> -> vector<2x256xf32>
    %c0_3 = arith.constant 0 : index
    %c0_4 = arith.constant 0 : index
    %3 = vector.load %arg2[%c0_3, %c0_4] : memref<1x256xf32, #tpu.memory_space<vmem>>, vector<1x256xf32>
    %4 = vector.broadcast %3 : vector<1x256xf32> to vector<2x256xf32>
    %5 = arith.addf %2, %4 : vector<2x256xf32>
    %6 = arith.truncf %5 : vector<2x256xf32> to vector<2x256xbf16>
    %c0_5 = arith.constant 0 : index
    %c0_6 = arith.constant 0 : index
    %7 = vector.load %arg3[%c0_5, %c0_6] : memref<256x128xbf16, #tpu.memory_space<vmem>>, vector<256x128xbf16>
    %cst_7 = arith.constant dense<0.000000e+00> : vector<2x128xf32>
    %8 = tpu.matmul %6, %7, %cst_7 {dimension_numbers = #tpu.dot_dimension_numbers<[1], [0], [0], [1], [0, 0, 1, 1], [], []>} : vector<2x256xbf16>, vector<256x128xbf16>, vector<2x128xf32> -> vector<2x128xf32>
    %c0_8 = arith.constant 0 : index
    %c0_9 = arith.constant 0 : index
    %9 = vector.load %arg4[%c0_8, %c0_9] : memref<1x128xf32, #tpu.memory_space<vmem>>, vector<1x128xf32>
    %10 = vector.broadcast %9 : vector<1x128xf32> to vector<2x128xf32>
    %11 = arith.addf %8, %10 : vector<2x128xf32>
    %c0_10 = arith.constant 0 : index
    %c0_11 = arith.constant 0 : index
    %12 = vector.load %arg5[%c0_10, %c0_11] : memref<2x128xf32, #tpu.memory_space<vmem>>, vector<2x128xf32>
    tpu.vector_store %arg5[%c0_10, %c0_11], %11 {strides = array<i32>} : memref<2x128xf32, #tpu.memory_space<vmem>>, vector<2x128xf32>,
    return
  }
}

</mosaic_0001>

<llo_original>
// kernel: backward_network_forward.1
$region0: #{backward_network_forward.1}
  #allocation0 [shape = 'u32[]', space=smem, size = 0x4, offset = 0x4, fixed_abs, tag = 'smem constant byte address 0x4 - core index']
  #allocation1 [shape = 'u32[144,128]{1,0:T(1,128)}', space=vmem, size = 0x12000, scoped, tag = 'internal scratch']
  %s0 = inlined_call_operand.vmem [shape: bf16[2,640], index: 0, kind: input, shape index: {}]
  %s1 = inlined_call_operand.hbm [shape: bf16[640,256], index: 1, kind: input, shape index: {}]
  %s2 = inlined_call_operand.vmem [shape: f32[1,256], index: 2, kind: input, shape index: {}]
  %s3 = inlined_call_operand.hbm [shape: bf16[256,128], index: 3, kind: input, shape index: {}]
  %s4 = inlined_call_operand.vmem [shape: f32[1,128], index: 4, kind: input, shape index: {}]
  %s5 = inlined_call_operand.hbm [shape: f32[2,128], index: 5, kind: output, shape index: {}]
  %s6 = sld [smem:[#allocation0]]
  $region38: #{backward_network_forward.1} parent=0
    _
  %s8 = ssub.s32 1, %s6
  %s9 = scalar_select 0, %s8, %s6
  $region1: #{backward_network_forward.1} parent=0
    #allocation2 [shape = 'u8[327680]{0}', space=vmem, size = 0x50000, scoped, tag = 'input window, operand 1, single buffered']
    #allocation3 [shape = 's32[1]{0}', space=sflag, size = 0x4, scoped, tag = 'scoped memory for backward_network_forward.1']
    #allocation4 [shape = 's32[1]{0}', space=sflag, size = 0x4, scoped, tag = 'scoped memory for backward_network_forward.1']
    #allocation5 [shape = 'u8[65536]{0}', space=vmem, size = 0x10000, scoped, tag = 'input window, operand 3, single buffered']
    #allocation6 [shape = 's32[1]{0}', space=sflag, size = 0x4, scoped, tag = 'scoped memory for backward_network_forward.1']
    #allocation7 [shape = 'u8[1024]{0}', space=vmem, size = 0x400, scoped, tag = 'output window, operand 0, single buffered']
    %10 = vsyncpa [#allocation3], 0
    %11 = vsyncpa [#allocation6], 0
    %12 = vsyncpa [#allocation4], 0
    // Predicated region
    $region2: #{backward_network_forward.1} parent=1 // pred_check
      _
    $region3: #{backward_network_forward.1} parent=1 // pred_check_branch
      %14 = sbr.rel (0) target = $region5
    $region4: #{backward_network_forward.1} parent=1 // pred_region
      _
    $region5: #{backward_network_forward.1} parent=1 // pred_fallthru
      _
    // Predicated region
    $region6: #{backward_network_forward.1} parent=1 // pred_check
      _
    $region7: #{backward_network_forward.1} parent=1 // pred_check_branch
      %16 = sbr.rel (0) target = $region9
    $region8: #{backward_network_forward.1} parent=1 // pred_region
      %s18 = ssub.s32 10240, 10240
      %19 = vsyncadd [#allocation3], %s18
      %s20 = sshll.u32 [#allocation2], 4
      %s21 = int_to_ptr.vmem [resolvable:$true] %s20
      %26 = dma.hbm_to_vmem [thread:$0]  %s1, 10240, %s21, [#allocation3], 128, 128, 8
    $region9: #{backward_network_forward.1} parent=1 // pred_fallthru
      _
    // Predicated region
    $region10: #{backward_network_forward.1} parent=1 // pred_check
      _
    $region11: #{backward_network_forward.1} parent=1 // pred_check_branch
      %28 = sbr.rel (0) target = $region13
    $region12: #{backward_network_forward.1} parent=1 // pred_region
      _
    $region13: #{backward_network_forward.1} parent=1 // pred_fallthru
      _
    // Predicated region
    $region14: #{backward_network_forward.1} parent=1 // pred_check
      _
    $region15: #{backward_network_forward.1} parent=1 // pred_check_branch
      %30 = sbr.rel (0) target = $region17
    $region16: #{backward_network_forward.1} parent=1 // pred_region
      %s32 = ssub.s32 2048, 2048
      %33 = vsyncadd [#allocation6], %s32
      %s34 = sshll.u32 [#allocation5], 4
      %s35 = int_to_ptr.vmem [resolvable:$true] %s34
      %40 = dma.hbm_to_vmem [thread:$0]  %s3, 2048, %s35, [#allocation6], 64, 64, 4
    $region17: #{backward_network_forward.1} parent=1 // pred_fallthru
      _
    // Predicated region
    $region18: #{backward_network_forward.1} parent=1 // pred_check
      _
    $region19: #{backward_network_forward.1} parent=1 // pred_check_branch
      %42 = sbr.rel (0) target = $region21
    $region20: #{backward_network_forward.1} parent=1 // pred_region
      _
    $region21: #{backward_network_forward.1} parent=1 // pred_fallthru
      _
    // Predicated region
    $region22: #{backward_network_forward.1} parent=1 // pred_check
      _
    $region23: #{backward_network_forward.1} parent=1 // pred_check_branch
      %44 = sbr.rel (0) target = $region25
    $region24: #{backward_network_forward.1} parent=1 // pred_region
      %45 = dma.done [#allocation3], 10240
    $region25: #{backward_network_forward.1} parent=1 // pred_fallthru
      _
    // Predicated region
    $region26: #{backward_network_forward.1} parent=1 // pred_check
      _
    $region27: #{backward_network_forward.1} parent=1 // pred_check_branch
      %47 = sbr.rel (0) target = $region29
    $region28: #{backward_network_forward.1} parent=1 // pred_region
      %48 = dma.done [#allocation6], 2048
    $region29: #{backward_network_forward.1} parent=1 // pred_fallthru
      _
    %v50 = vld [vmem:[%s0] sm:$0x1f]
    %v51 = vld [vmem:[#allocation2] sm:$0xff]
    %v52 = vld [vmem:[#allocation2 + $0x8] sm:$0xff]
    %v53 = vld [vmem:[#allocation2 + $0x10] sm:$0xff]
    %v54 = vld [vmem:[#allocation2 + $0x18] sm:$0xff]
    %v55 = vld [vmem:[#allocation2 + $0x20] sm:$0xff]
    %v56 = vld [vmem:[#allocation2 + $0x28] sm:$0xff]
    %v57 = vld [vmem:[#allocation2 + $0x30] sm:$0xff]
    %v58 = vld [vmem:[#allocation2 + $0x38] sm:$0xff]
    %v59 = vld [vmem:[#allocation2 + $0x40] sm:$0xff]
    %v60 = vld [vmem:[#allocation2 + $0x48] sm:$0xff]
    %v61 = vld [vmem:[#allocation2 + $0x50] sm:$0xff]
    %v62 = vld [vmem:[#allocation2 + $0x58] sm:$0xff]
    %v63 = vld [vmem:[#allocation2 + $0x60] sm:$0xff]
    %v64 = vld [vmem:[#allocation2 + $0x68] sm:$0xff]
    %v65 = vld [vmem:[#allocation2 + $0x70] sm:$0xff]
    %v66 = vld [vmem:[#allocation2 + $0x78] sm:$0xff]
    %v67 = vld [vmem:[#allocation2 + $0x80] sm:$0xff]
    %v68 = vld [vmem:[#allocation2 + $0x88] sm:$0xff]
    %v69 = vld [vmem:[#allocation2 + $0x90] sm:$0xff]
    %v70 = vld [vmem:[#allocation2 + $0x98] sm:$0xff]
    %v71 = vld [vmem:[#allocation2 + $0xa0] sm:$0xff]
    %v72 = vld [vmem:[#allocation2 + $0xa8] sm:$0xff]
    %v73 = vld [vmem:[#allocation2 + $0xb0] sm:$0xff]
    %v74 = vld [vmem:[#allocation2 + $0xb8] sm:$0xff]
    %v75 = vld [vmem:[#allocation2 + $0xc0] sm:$0xff]
    %v76 = vld [vmem:[#allocation2 + $0xc8] sm:$0xff]
    %v77 = vld [vmem:[#allocation2 + $0xd0] sm:$0xff]
    %v78 = vld [vmem:[#allocation2 + $0xd8] sm:$0xff]
    %v79 = vld [vmem:[#allocation2 + $0xe0] sm:$0xff]
    %v80 = vld [vmem:[#allocation2 + $0xe8] sm:$0xff]
    %v81 = vld [vmem:[#allocation2 + $0xf0] sm:$0xff]
    %v82 = vld [vmem:[#allocation2 + $0xf8] sm:$0xff]
    %v83 = vld [vmem:[#allocation2 + $0x100] sm:$0xff]
    %v84 = vld [vmem:[#allocation2 + $0x108] sm:$0xff]
    %v85 = vld [vmem:[#allocation2 + $0x110] sm:$0xff]
    %v86 = vld [vmem:[#allocation2 + $0x118] sm:$0xff]
    %v87 = vld [vmem:[#allocation2 + $0x120] sm:$0xff]
    %v88 = vld [vmem:[#allocation2 + $0x128] sm:$0xff]
    %v89 = vld [vmem:[#allocation2 + $0x130] sm:$0xff]
    %v90 = vld [vmem:[#allocation2 + $0x138] sm:$0xff]
    %v91 = vld [vmem:[#allocation2 + $0x140] sm:$0xff]
    %v92 = vld [vmem:[#allocation2 + $0x148] sm:$0xff]
    %v93 = vld [vmem:[#allocation2 + $0x150] sm:$0xff]
    %v94 = vld [vmem:[#allocation2 + $0x158] sm:$0xff]
    %v95 = vld [vmem:[#allocation2 + $0x160] sm:$0xff]
    %v96 = vld [vmem:[#allocation2 + $0x168] sm:$0xff]
    %v97 = vld [vmem:[#allocation2 + $0x170] sm:$0xff]
    %v98 = vld [vmem:[#allocation2 + $0x178] sm:$0xff]
    %v99 = vld [vmem:[#allocation2 + $0x180] sm:$0xff]
    %v100 = vld [vmem:[#allocation2 + $0x188] sm:$0xff]
    %v101 = vld [vmem:[#allocation2 + $0x190] sm:$0xff]
    %v102 = vld [vmem:[#allocation2 + $0x198] sm:$0xff]
    %v103 = vld [vmem:[#allocation2 + $0x1a0] sm:$0xff]
    %v104 = vld [vmem:[#allocation2 + $0x1a8] sm:$0xff]
    %v105 = vld [vmem:[#allocation2 + $0x1b0] sm:$0xff]
    %v106 = vld [vmem:[#allocation2 + $0x1b8] sm:$0xff]
    %v107 = vld [vmem:[#allocation2 + $0x1c0] sm:$0xff]
    %v108 = vld [vmem:[#allocation2 + $0x1c8] sm:$0xff]
    %v109 = vld [vmem:[#allocation2 + $0x1d0] sm:$0xff]
    %v110 = vld [vmem:[#allocation2 + $0x1d8] sm:$0xff]
    %v111 = vld [vmem:[#allocation2 + $0x1e0] sm:$0xff]
    %v112 = vld [vmem:[#allocation2 + $0x1e8] sm:$0xff]
    %v113 = vld [vmem:[#allocation2 + $0x1f0] sm:$0xff]
    %v114 = vld [vmem:[#allocation2 + $0x1f8] sm:$0xff]
    %v115 = vld [vmem:[#allocation2 + $0x200] sm:$0xff]
    %v116 = vld [vmem:[#allocation2 + $0x208] sm:$0xff]
    %v117 = vld [vmem:[#allocation2 + $0x210] sm:$0xff]
    %v118 = vld [vmem:[#allocation2 + $0x218] sm:$0xff]
    %v119 = vld [vmem:[#allocation2 + $0x220] sm:$0xff]
    %v120 = vld [vmem:[#allocation2 + $0x228] sm:$0xff]
    %v121 = vld [vmem:[#allocation2 + $0x230] sm:$0xff]
    %v122 = vld [vmem:[#allocation2 + $0x238] sm:$0xff]
    %v123 = vld [vmem:[#allocation2 + $0x240] sm:$0xff]
    %v124 = vld [vmem:[#allocation2 + $0x248] sm:$0xff]
    %v125 = vld [vmem:[#allocation2 + $0x250] sm:$0xff]
    %v126 = vld [vmem:[#allocation2 + $0x258] sm:$0xff]
    %v127 = vld [vmem:[#allocation2 + $0x260] sm:$0xff]
    %v128 = vld [vmem:[#allocation2 + $0x268] sm:$0xff]
    %v129 = vld [vmem:[#allocation2 + $0x270] sm:$0xff]
    %v130 = vld [vmem:[#allocation2 + $0x278] sm:$0xff]
    %v131 = vld [vmem:[%s2] sm:$0x3]
    %v133 = vlaneseq
    %v134 = vshrl.u32 %v133, 7
    %v135 = vsub.s32 0, %v134
    %v136 = vrot.slane %v131, %v135
    %v137 = vlaneseq
    %v138 = vshrl.u32 %v137, 7
    %v139 = vsub.s32 1, %v138
    %v140 = vrot.slane %v131, %v139
    %v144 = vcombine.high %v50, %v50
    %v146 = vunpack.c.l.s4 1966171168
    %v147 = vunpack.c.0.s8 %v146
    %v148 = vlaneseq
    %v149 = vshrl.u32 %v148, 7
    %v150 = vsub.s32 %v147, %v149
    %v151 = vrot.slane %v50, %v150
    %v153 = vunpack.c.l.s4 1966171168
    %v154 = vunpack.c.0.s8 %v153
    %v155 = vlaneseq
    %v156 = vshrl.u32 %v155, 7
    %v157 = vsub.s32 %v154, %v156
    %v158 = vrot.slane %v144, %v157
    %v159 = vcombine.high %v151, %v151
    %v161 = vunpack.c.l.s4 1966171168
    %v162 = vunpack.c.0.s8 %v161
    %v163 = vlaneseq
    %v164 = vshrl.u32 %v163, 7
    %v165 = vsub.s32 %v162, %v164
    %v166 = vrot.slane %v151, %v165
    %v168 = vunpack.c.l.s4 1966171168
    %v169 = vunpack.c.0.s8 %v168
    %v170 = vlaneseq
    %v171 = vshrl.u32 %v170, 7
    %v172 = vsub.s32 %v169, %v171
    %v173 = vrot.slane %v158, %v172
    %v175 = vunpack.c.l.s4 1966171168
    %v176 = vunpack.c.0.s8 %v175
    %v177 = vlaneseq
    %v178 = vshrl.u32 %v177, 7
    %v179 = vsub.s32 %v176, %v178
    %v180 = vrot.slane %v159, %v179
    %v181 = vcombine.high %v166, %v166
    %v182 = vcombine.high %v180, %v180
    %v268 = vunpack.c.l.b16 %v51
    %v269 = vunpack.c.h.b16 %v51
    %v270 = vunpack.c.l.b16 %v52
    %v271 = vunpack.c.h.b16 %v52
    %v272 = vunpack.c.l.b16 %v53
    %v273 = vunpack.c.h.b16 %v53
    %v274 = vunpack.c.l.b16 %v54
    %v275 = vunpack.c.h.b16 %v54
    %v276 = vunpack.c.l.b16 %v55
    %v277 = vunpack.c.h.b16 %v55
    %v278 = vunpack.c.l.b16 %v56
    %v279 = vunpack.c.h.b16 %v56
    %v280 = vunpack.c.l.b16 %v57
    %v281 = vunpack.c.h.b16 %v57
    %v282 = vunpack.c.l.b16 %v58
    %v283 = vunpack.c.h.b16 %v58
    %v284 = vunpack.c.l.b16 %v59
    %v285 = vunpack.c.h.b16 %v59
    %v286 = vunpack.c.l.b16 %v60
    %v287 = vunpack.c.h.b16 %v60
    %v288 = vunpack.c.l.b16 %v61
    %v289 = vunpack.c.h.b16 %v61
    %v290 = vunpack.c.l.b16 %v62
    %v291 = vunpack.c.h.b16 %v62
    %v292 = vunpack.c.l.b16 %v63
    %v293 = vunpack.c.h.b16 %v63
    %v294 = vunpack.c.l.b16 %v64
    %v295 = vunpack.c.h.b16 %v64
    %v296 = vunpack.c.l.b16 %v65
    %v297 = vunpack.c.h.b16 %v65
    %v298 = vunpack.c.l.b16 %v66
    %v299 = vunpack.c.h.b16 %v66
    %v300 = vunpack.c.l.b16 %v67
    %v301 = vunpack.c.h.b16 %v67
    %v302 = vunpack.c.l.b16 %v68
    %v303 = vunpack.c.h.b16 %v68
    %v304 = vunpack.c.l.b16 %v69
    %v305 = vunpack.c.h.b16 %v69
    %v306 = vunpack.c.l.b16 %v70
    %v307 = vunpack.c.h.b16 %v70
    %v308 = vunpack.c.l.b16 %v71
    %v309 = vunpack.c.h.b16 %v71
    %v310 = vunpack.c.l.b16 %v72
    %v311 = vunpack.c.h.b16 %v72
    %v312 = vunpack.c.l.b16 %v73
    %v313 = vunpack.c.h.b16 %v73
    %v314 = vunpack.c.l.b16 %v74
    %v315 = vunpack.c.h.b16 %v74
    %v316 = vunpack.c.l.b16 %v75
    %v317 = vunpack.c.h.b16 %v75
    %v318 = vunpack.c.l.b16 %v76
    %v319 = vunpack.c.h.b16 %v76
    %v320 = vunpack.c.l.b16 %v77
    %v321 = vunpack.c.h.b16 %v77
    %v322 = vunpack.c.l.b16 %v78
    %v323 = vunpack.c.h.b16 %v78
    %v324 = vunpack.c.l.b16 %v79
    %v325 = vunpack.c.h.b16 %v79
    %v326 = vunpack.c.l.b16 %v80
    %v327 = vunpack.c.h.b16 %v80
    %v328 = vunpack.c.l.b16 %v81
    %v329 = vunpack.c.h.b16 %v81
    %v330 = vunpack.c.l.b16 %v82
    %v331 = vunpack.c.h.b16 %v82
    %v332 = vunpack.c.l.b16 %v83
    %v333 = vunpack.c.h.b16 %v83
    %v334 = vunpack.c.l.b16 %v84
    %v335 = vunpack.c.h.b16 %v84
    %v336 = vunpack.c.l.b16 %v85
    %v337 = vunpack.c.h.b16 %v85
    %v338 = vunpack.c.l.b16 %v86
    %v339 = vunpack.c.h.b16 %v86
    %v340 = vunpack.c.l.b16 %v87
    %v341 = vunpack.c.h.b16 %v87
    %v342 = vunpack.c.l.b16 %v88
    %v343 = vunpack.c.h.b16 %v88
    %v344 = vunpack.c.l.b16 %v89
    %v345 = vunpack.c.h.b16 %v89
    %v346 = vunpack.c.l.b16 %v90
    %v347 = vunpack.c.h.b16 %v90
    %v348 = vunpack.c.l.b16 %v91
    %v349 = vunpack.c.h.b16 %v91
    %v350 = vunpack.c.l.b16 %v92
    %v351 = vunpack.c.h.b16 %v92
    %v352 = vunpack.c.l.b16 %v93
    %v353 = vunpack.c.h.b16 %v93
    %v354 = vunpack.c.l.b16 %v94
    %v355 = vunpack.c.h.b16 %v94
    %v356 = vunpack.c.l.b16 %v95
    %v357 = vunpack.c.h.b16 %v95
    %v358 = vunpack.c.l.b16 %v96
    %v359 = vunpack.c.h.b16 %v96
    %v360 = vunpack.c.l.b16 %v97
    %v361 = vunpack.c.h.b16 %v97
    %v362 = vunpack.c.l.b16 %v98
    %v363 = vunpack.c.h.b16 %v98
    %v364 = vunpack.c.l.b16 %v99
    %v365 = vunpack.c.h.b16 %v99
    %v366 = vunpack.c.l.b16 %v100
    %v367 = vunpack.c.h.b16 %v100
    %v368 = vunpack.c.l.b16 %v101
    %v369 = vunpack.c.h.b16 %v101
    %v370 = vunpack.c.l.b16 %v102
    %v371 = vunpack.c.h.b16 %v102
    %v372 = vunpack.c.l.b16 %v103
    %v373 = vunpack.c.h.b16 %v103
    %v374 = vunpack.c.l.b16 %v104
    %v375 = vunpack.c.h.b16 %v104
    %v376 = vunpack.c.l.b16 %v105
    %v377 = vunpack.c.h.b16 %v105
    %v378 = vunpack.c.l.b16 %v106
    %v379 = vunpack.c.h.b16 %v106
    %v380 = vunpack.c.l.b16 %v107
    %v381 = vunpack.c.h.b16 %v107
    %v382 = vunpack.c.l.b16 %v108
    %v383 = vunpack.c.h.b16 %v108
    %v384 = vunpack.c.l.b16 %v109
    %v385 = vunpack.c.h.b16 %v109
    %v386 = vunpack.c.l.b16 %v110
    %v387 = vunpack.c.h.b16 %v110
    %v388 = vunpack.c.l.b16 %v111
    %v389 = vunpack.c.h.b16 %v111
    %v390 = vunpack.c.l.b16 %v112
    %v391 = vunpack.c.h.b16 %v112
    %v392 = vunpack.c.l.b16 %v113
    %v393 = vunpack.c.h.b16 %v113
    %v394 = vunpack.c.l.b16 %v114
    %v395 = vunpack.c.h.b16 %v114
    %v396 = vunpack.c.l.b16 %v115
    %v397 = vunpack.c.h.b16 %v115
    %v398 = vunpack.c.l.b16 %v116
    %v399 = vunpack.c.h.b16 %v116
    %v400 = vunpack.c.l.b16 %v117
    %v401 = vunpack.c.h.b16 %v117
    %v402 = vunpack.c.l.b16 %v118
    %v403 = vunpack.c.h.b16 %v118
    %v404 = vunpack.c.l.b16 %v119
    %v405 = vunpack.c.h.b16 %v119
    %v406 = vunpack.c.l.b16 %v120
    %v407 = vunpack.c.h.b16 %v120
    %v408 = vunpack.c.l.b16 %v121
    %v409 = vunpack.c.h.b16 %v121
    %v410 = vunpack.c.l.b16 %v122
    %v411 = vunpack.c.h.b16 %v122
    %v412 = vunpack.c.l.b16 %v123
    %v413 = vunpack.c.h.b16 %v123
    %v414 = vunpack.c.l.b16 %v124
    %v415 = vunpack.c.h.b16 %v124
    %v416 = vunpack.c.l.b16 %v125
    %v417 = vunpack.c.h.b16 %v125
    %v418 = vunpack.c.l.b16 %v126
    %v419 = vunpack.c.h.b16 %v126
    %v420 = vunpack.c.l.b16 %v127
    %v421 = vunpack.c.h.b16 %v127
    %v422 = vunpack.c.l.b16 %v128
    %v423 = vunpack.c.h.b16 %v128
    %v424 = vunpack.c.l.b16 %v129
    %v425 = vunpack.c.h.b16 %v129
    %v426 = vunpack.c.l.b16 %v130
    %v427 = vunpack.c.h.b16 %v130
    %v428 = vpack.c.b16 %v270, %v268
    %v429 = vpack.c.b16 %v271, %v269
    %v430 = vpack.c.b16 %v274, %v272
    %v431 = vpack.c.b16 %v275, %v273
    %v432 = vpack.c.b16 %v278, %v276
    %v433 = vpack.c.b16 %v279, %v277
    %v434 = vpack.c.b16 %v282, %v280
    %v435 = vpack.c.b16 %v283, %v281
    %v436 = vpack.c.b16 %v286, %v284
    %v437 = vpack.c.b16 %v287, %v285
    %v438 = vpack.c.b16 %v290, %v288
    %v439 = vpack.c.b16 %v291, %v289
    %v440 = vpack.c.b16 %v294, %v292
    %v441 = vpack.c.b16 %v295, %v293
    %v442 = vpack.c.b16 %v298, %v296
    %v443 = vpack.c.b16 %v299, %v297
    %v444 = vpack.c.b16 %v302, %v300
    %v445 = vpack.c.b16 %v303, %v301
    %v446 = vpack.c.b16 %v306, %v304
    %v447 = vpack.c.b16 %v307, %v305
    %v448 = vpack.c.b16 %v310, %v308
    %v449 = vpack.c.b16 %v311, %v309
    %v450 = vpack.c.b16 %v314, %v312
    %v451 = vpack.c.b16 %v315, %v313
    %v452 = vpack.c.b16 %v318, %v316
    %v453 = vpack.c.b16 %v319, %v317
    %v454 = vpack.c.b16 %v322, %v320
    %v455 = vpack.c.b16 %v323, %v321
    %v456 = vpack.c.b16 %v326, %v324
    %v457 = vpack.c.b16 %v327, %v325
    %v458 = vpack.c.b16 %v330, %v328
    %v459 = vpack.c.b16 %v331, %v329
    %v460 = vpack.c.b16 %v334, %v332
    %v461 = vpack.c.b16 %v335, %v333
    %v462 = vpack.c.b16 %v338, %v336
    %v463 = vpack.c.b16 %v339, %v337
    %v464 = vpack.c.b16 %v342, %v340
    %v465 = vpack.c.b16 %v343, %v341
    %v466 = vpack.c.b16 %v346, %v344
    %v467 = vpack.c.b16 %v347, %v345
    %v468 = vpack.c.b16 %v350, %v348
    %v469 = vpack.c.b16 %v351, %v349
    %v470 = vpack.c.b16 %v354, %v352
    %v471 = vpack.c.b16 %v355, %v353
    %v472 = vpack.c.b16 %v358, %v356
    %v473 = vpack.c.b16 %v359, %v357
    %v474 = vpack.c.b16 %v362, %v360
    %v475 = vpack.c.b16 %v363, %v361
    %v476 = vpack.c.b16 %v366, %v364
    %v477 = vpack.c.b16 %v367, %v365
    %v478 = vpack.c.b16 %v370, %v368
    %v479 = vpack.c.b16 %v371, %v369
    %v480 = vpack.c.b16 %v374, %v372
    %v481 = vpack.c.b16 %v375, %v373
    %v482 = vpack.c.b16 %v378, %v376
    %v483 = vpack.c.b16 %v379, %v377
    %v484 = vpack.c.b16 %v382, %v380
    %v485 = vpack.c.b16 %v383, %v381
    %v486 = vpack.c.b16 %v386, %v384
    %v487 = vpack.c.b16 %v387, %v385
    %v488 = vpack.c.b16 %v390, %v388
    %v489 = vpack.c.b16 %v391, %v389
    %v490 = vpack.c.b16 %v394, %v392
    %v491 = vpack.c.b16 %v395, %v393
    %v492 = vpack.c.b16 %v398, %v396
    %v493 = vpack.c.b16 %v399, %v397
    %v494 = vpack.c.b16 %v402, %v400
    %v495 = vpack.c.b16 %v403, %v401
    %v496 = vpack.c.b16 %v406, %v404
    %v497 = vpack.c.b16 %v407, %v405
    %v498 = vpack.c.b16 %v410, %v408
    %v499 = vpack.c.b16 %v411, %v409
    %v500 = vpack.c.b16 %v414, %v412
    %v501 = vpack.c.b16 %v415, %v413
    %v502 = vpack.c.b16 %v418, %v416
    %v503 = vpack.c.b16 %v419, %v417
    %v504 = vpack.c.b16 %v422, %v420
    %v505 = vpack.c.b16 %v423, %v421
    %v506 = vpack.c.b16 %v426, %v424
    %v507 = vpack.c.b16 %v427, %v425
    %588 = vmatprep.subr.bf16.mxu0 %v429
    %589 = vmatpush1.bf16.msra.mxu0 %v428
    %590 = vmatprep.subr.bf16.mxu0 %v431
    %591 = vmatpush1.bf16.msra.mxu0 %v430
    %592 = vmatprep.subr.bf16.mxu0 %v433
    %593 = vmatpush1.bf16.msra.mxu0 %v432
    %594 = vmatprep.subr.bf16.mxu0 %v435
    %595 = vmatpush1.bf16.msra.mxu0 %v434
    %596 = vmatprep.subr.bf16.mxu0 %v437
    %597 = vmatpush1.bf16.msra.mxu0 %v436
    %598 = vmatprep.subr.bf16.mxu0 %v439
    %599 = vmatpush1.bf16.msra.mxu0 %v438
    %600 = vmatprep.subr.bf16.mxu0 %v441
    %601 = vmatpush1.bf16.msra.mxu0 %v440
    %602 = vmatprep.subr.bf16.mxu0 %v443
    %603 = vmatpush1.bf16.msra.mxu0 %v442
    %604 = vmatprep.subr.bf16.mxu0 %v445
    %605 = vmatpush1.bf16.msra.mxu0 %v444
    %606 = vmatprep.subr.bf16.mxu0 %v447
    %607 = vmatpush1.bf16.msra.mxu0 %v446
    %608 = vmatprep.subr.bf16.mxu0 %v449
    %609 = vmatpush1.bf16.msra.mxu0 %v448
    %610 = vmatprep.subr.bf16.mxu0 %v451
    %611 = vmatpush1.bf16.msra.mxu0 %v450
    %612 = vmatprep.subr.bf16.mxu0 %v453
    %613 = vmatpush1.bf16.msra.mxu0 %v452
    %614 = vmatprep.subr.bf16.mxu0 %v455
    %615 = vmatpush1.bf16.msra.mxu0 %v454
    %616 = vmatprep.subr.bf16.mxu0 %v457
    %617 = vmatpush1.bf16.msra.mxu0 %v456
    %618 = vmatprep.subr.bf16.mxu0 %v459
    %619 = vmatpush1.bf16.msra.mxu0 %v458
    %620 = vmatprep.mubr.bf16.mxu0 %v180
    %621 = vmatmul.mubr.bf16.gmra.mrb[0].mxu0 %v166
    %v622 = vpop.f32.mrb[0].mxu0
    %v623 = vadd.f32 %v136, %v622
    %v624 = vpop.f32.mrb[0].mxu0
    %v625 = vadd.f32 %v140, %v624
    %v626 = vpop.f32.mrb[0].mxu0
    %v627 = vpop.f32.mrb[0].mxu0
    %628 = vdwg.mxu0
    %629 = vmatprep.subr.bf16.mxu0 %v461
    %630 = vmatpush1.bf16.msra.mxu0 %v460
    %631 = vmatprep.subr.bf16.mxu0 %v463
    %632 = vmatpush1.bf16.msra.mxu0 %v462
    %633 = vmatprep.subr.bf16.mxu0 %v465
    %634 = vmatpush1.bf16.msra.mxu0 %v464
    %635 = vmatprep.subr.bf16.mxu0 %v467
    %636 = vmatpush1.bf16.msra.mxu0 %v466
    %637 = vmatprep.subr.bf16.mxu0 %v469
    %638 = vmatpush1.bf16.msra.mxu0 %v468
    %639 = vmatprep.subr.bf16.mxu0 %v471
    %640 = vmatpush1.bf16.msra.mxu0 %v470
    %641 = vmatprep.subr.bf16.mxu0 %v473
    %642 = vmatpush1.bf16.msra.mxu0 %v472
    %643 = vmatprep.subr.bf16.mxu0 %v475
    %644 = vmatpush1.bf16.msra.mxu0 %v474
    %645 = vmatprep.subr.bf16.mxu0 %v477
    %646 = vmatpush1.bf16.msra.mxu0 %v476
    %647 = vmatprep.subr.bf16.mxu0 %v479
    %648 = vmatpush1.bf16.msra.mxu0 %v478
    %649 = vmatprep.subr.bf16.mxu0 %v481
    %650 = vmatpush1.bf16.msra.mxu0 %v480
    %651 = vmatprep.subr.bf16.mxu0 %v483
    %652 = vmatpush1.bf16.msra.mxu0 %v482
    %653 = vmatprep.subr.bf16.mxu0 %v485
    %654 = vmatpush1.bf16.msra.mxu0 %v484
    %655 = vmatprep.subr.bf16.mxu0 %v487
    %656 = vmatpush1.bf16.msra.mxu0 %v486
    %657 = vmatprep.subr.bf16.mxu0 %v489
    %658 = vmatpush1.bf16.msra.mxu0 %v488
    %659 = vmatprep.subr.bf16.mxu0 %v491
    %660 = vmatpush1.bf16.msra.mxu0 %v490
    %661 = vmatprep.mubr.bf16.mxu0 %v182
    %662 = vmatmul.mubr.bf16.gmra.mrb[0].mxu0 %v181
    %v663 = vpop.f32.mrb[0].mxu0
    %v664 = vadd.f32 %v623, %v663
    %v665 = vpop.f32.mrb[0].mxu0
    %v666 = vadd.f32 %v625, %v665
    %v667 = vpop.f32.mrb[0].mxu0
    %v668 = vpop.f32.mrb[0].mxu0
    %669 = vdwg.mxu0
    %670 = vmatprep.subr.bf16.mxu0 %v493
    %671 = vmatpush1.bf16.msra.mxu0 %v492
    %672 = vmatprep.subr.bf16.mxu0 %v495
    %673 = vmatpush1.bf16.msra.mxu0 %v494
    %674 = vmatprep.subr.bf16.mxu0 %v497
    %675 = vmatpush1.bf16.msra.mxu0 %v496
    %676 = vmatprep.subr.bf16.mxu0 %v499
    %677 = vmatpush1.bf16.msra.mxu0 %v498
    %678 = vmatprep.subr.bf16.mxu0 %v501
    %679 = vmatpush1.bf16.msra.mxu0 %v500
    %680 = vmatprep.subr.bf16.mxu0 %v503
    %681 = vmatpush1.bf16.msra.mxu0 %v502
    %682 = vmatprep.subr.bf16.mxu0 %v505
    %683 = vmatpush1.bf16.msra.mxu0 %v504
    %684 = vmatprep.subr.bf16.mxu0 %v507
    %685 = vmatpush1.bf16.msra.mxu0 %v506
    %686 = vmatprep.subr.bf16.mxu0 0
    %687 = vmatpush1.bf16.msra.mxu0 0
    %688 = vmatprep.subr.bf16.mxu0 0
    %689 = vmatpush1.bf16.msra.mxu0 0
    %690 = vmatprep.subr.bf16.mxu0 0
    %691 = vmatpush1.bf16.msra.mxu0 0
    %692 = vmatprep.subr.bf16.mxu0 0
    %693 = vmatpush1.bf16.msra.mxu0 0
    %694 = vmatprep.subr.bf16.mxu0 0
    %695 = vmatpush1.bf16.msra.mxu0 0
    %696 = vmatprep.subr.bf16.mxu0 0
    %697 = vmatpush1.bf16.msra.mxu0 0
    %698 = vmatprep.subr.bf16.mxu0 0
    %699 = vmatpush1.bf16.msra.mxu0 0
    %700 = vmatprep.subr.bf16.mxu0 0
    %701 = vmatpush1.bf16.msra.mxu0 0
    %702 = vmatprep.mubr.bf16.mxu0 0
    %703 = vmatmul.mubr.bf16.gmra.mrb[0].mxu0 %v173
    %v704 = vpop.f32.mrb[0].mxu0
    %v705 = vadd.f32 %v664, %v704
    %v706 = vpop.f32.mrb[0].mxu0
    %v707 = vadd.f32 %v666, %v706
    %v708 = vpop.f32.mrb[0].mxu0
    %v709 = vpop.f32.mrb[0].mxu0
    %710 = vdwg.mxu0
    %v711 = vpack.c.bf16 %v705, %v705
    %v712 = vpack.c.bf16 %v707, %v707
    %v713 = vld [vmem:[#allocation5] sm:$0xf]
    %v714 = vld [vmem:[#allocation5 + $0x4] sm:$0xf]
    %v715 = vld [vmem:[#allocation5 + $0x8] sm:$0xf]
    %v716 = vld [vmem:[#allocation5 + $0xc] sm:$0xf]
    %v717 = vld [vmem:[#allocation5 + $0x10] sm:$0xf]
    %v718 = vld [vmem:[#allocation5 + $0x14] sm:$0xf]
    %v719 = vld [vmem:[#allocation5 + $0x18] sm:$0xf]
    %v720 = vld [vmem:[#allocation5 + $0x1c] sm:$0xf]
    %v721 = vld [vmem:[#allocation5 + $0x20] sm:$0xf]
    %v722 = vld [vmem:[#allocation5 + $0x24] sm:$0xf]
    %v723 = vld [vmem:[#allocation5 + $0x28] sm:$0xf]
    %v724 = vld [vmem:[#allocation5 + $0x2c] sm:$0xf]
    %v725 = vld [vmem:[#allocation5 + $0x30] sm:$0xf]
    %v726 = vld [vmem:[#allocation5 + $0x34] sm:$0xf]
    %v727 = vld [vmem:[#allocation5 + $0x38] sm:$0xf]
    %v728 = vld [vmem:[#allocation5 + $0x3c] sm:$0xf]
    %v729 = vld [vmem:[#allocation5 + $0x40] sm:$0xf]
    %v730 = vld [vmem:[#allocation5 + $0x44] sm:$0xf]
    %v731 = vld [vmem:[#allocation5 + $0x48] sm:$0xf]
    %v732 = vld [vmem:[#allocation5 + $0x4c] sm:$0xf]
    %v733 = vld [vmem:[#allocation5 + $0x50] sm:$0xf]
    %v734 = vld [vmem:[#allocation5 + $0x54] sm:$0xf]
    %v735 = vld [vmem:[#allocation5 + $0x58] sm:$0xf]
    %v736 = vld [vmem:[#allocation5 + $0x5c] sm:$0xf]
    %v737 = vld [vmem:[#allocation5 + $0x60] sm:$0xf]
    %v738 = vld [vmem:[#allocation5 + $0x64] sm:$0xf]
    %v739 = vld [vmem:[#allocation5 + $0x68] sm:$0xf]
    %v740 = vld [vmem:[#allocation5 + $0x6c] sm:$0xf]
    %v741 = vld [vmem:[#allocation5 + $0x70] sm:$0xf]
    %v742 = vld [vmem:[#allocation5 + $0x74] sm:$0xf]
    %v743 = vld [vmem:[#allocation5 + $0x78] sm:$0xf]
    %v744 = vld [vmem:[#allocation5 + $0x7c] sm:$0xf]
    %v745 = vld [vmem:[%s4] sm:$0x1]
    %v747 = vlaneseq
    %v748 = vshrl.u32 %v747, 7
    %v749 = vsub.s32 0, %v748
    %v750 = vrot.slane %v745, %v749
    %v784 = vunpack.c.l.b16 %v713
    %v785 = vunpack.c.l.b16 %v714
    %v786 = vunpack.c.l.b16 %v715
    %v787 = vunpack.c.l.b16 %v716
    %v788 = vunpack.c.l.b16 %v717
    %v789 = vunpack.c.l.b16 %v718
    %v790 = vunpack.c.l.b16 %v719
    %v791 = vunpack.c.l.b16 %v720
    %v792 = vunpack.c.l.b16 %v721
    %v793 = vunpack.c.l.b16 %v722
    %v794 = vunpack.c.l.b16 %v723
    %v795 = vunpack.c.l.b16 %v724
    %v796 = vunpack.c.l.b16 %v725
    %v797 = vunpack.c.l.b16 %v726
    %v798 = vunpack.c.l.b16 %v727
    %v799 = vunpack.c.l.b16 %v728
    %v800 = vunpack.c.l.b16 %v729
    %v801 = vunpack.c.l.b16 %v730
    %v802 = vunpack.c.l.b16 %v731
    %v803 = vunpack.c.l.b16 %v732
    %v804 = vunpack.c.l.b16 %v733
    %v805 = vunpack.c.l.b16 %v734
    %v806 = vunpack.c.l.b16 %v735
    %v807 = vunpack.c.l.b16 %v736
    %v808 = vunpack.c.l.b16 %v737
    %v809 = vunpack.c.l.b16 %v738
    %v810 = vunpack.c.l.b16 %v739
    %v811 = vunpack.c.l.b16 %v740
    %v812 = vunpack.c.l.b16 %v741
    %v813 = vunpack.c.l.b16 %v742
    %v814 = vunpack.c.l.b16 %v743
    %v815 = vunpack.c.l.b16 %v744
    %v816 = vpack.c.b16 %v785, %v784
    %v817 = vpack.c.b16 %v787, %v786
    %v818 = vpack.c.b16 %v789, %v788
    %v819 = vpack.c.b16 %v791, %v790
    %v820 = vpack.c.b16 %v793, %v792
    %v821 = vpack.c.b16 %v795, %v794
    %v822 = vpack.c.b16 %v797, %v796
    %v823 = vpack.c.b16 %v799, %v798
    %v824 = vpack.c.b16 %v801, %v800
    %v825 = vpack.c.b16 %v803, %v802
    %v826 = vpack.c.b16 %v805, %v804
    %v827 = vpack.c.b16 %v807, %v806
    %v828 = vpack.c.b16 %v809, %v808
    %v829 = vpack.c.b16 %v811, %v810
    %v830 = vpack.c.b16 %v813, %v812
    %v831 = vpack.c.b16 %v815, %v814
    %848 = vmatprep.subr.bf16.mxu0 0
    %849 = vmatpush1.bf16.msra.mxu0 %v816
    %850 = vmatprep.subr.bf16.mxu0 0
    %851 = vmatpush1.bf16.msra.mxu0 %v817
    %852 = vmatprep.subr.bf16.mxu0 0
    %853 = vmatpush1.bf16.msra.mxu0 %v818
    %854 = vmatprep.subr.bf16.mxu0 0
    %855 = vmatpush1.bf16.msra.mxu0 %v819
    %856 = vmatprep.subr.bf16.mxu0 0
    %857 = vmatpush1.bf16.msra.mxu0 %v820
    %858 = vmatprep.subr.bf16.mxu0 0
    %859 = vmatpush1.bf16.msra.mxu0 %v821
    %860 = vmatprep.subr.bf16.mxu0 0
    %861 = vmatpush1.bf16.msra.mxu0 %v822
    %862 = vmatprep.subr.bf16.mxu0 0
    %863 = vmatpush1.bf16.msra.mxu0 %v823
    %864 = vmatprep.subr.bf16.mxu0 0
    %865 = vmatpush1.bf16.msra.mxu0 %v824
    %866 = vmatprep.subr.bf16.mxu0 0
    %867 = vmatpush1.bf16.msra.mxu0 %v825
    %868 = vmatprep.subr.bf16.mxu0 0
    %869 = vmatpush1.bf16.msra.mxu0 %v826
    %870 = vmatprep.subr.bf16.mxu0 0
    %871 = vmatpush1.bf16.msra.mxu0 %v827
    %872 = vmatprep.subr.bf16.mxu0 0
    %873 = vmatpush1.bf16.msra.mxu0 %v828
    %874 = vmatprep.subr.bf16.mxu0 0
    %875 = vmatpush1.bf16.msra.mxu0 %v829
    %876 = vmatprep.subr.bf16.mxu0 0
    %877 = vmatpush1.bf16.msra.mxu0 %v830
    %878 = vmatprep.subr.bf16.mxu0 0
    %879 = vmatpush1.bf16.msra.mxu0 %v831
    %880 = vmatprep.mubr.bf16.mxu0 %v712
    %881 = vmatmul.mubr.bf16.gmra.mrb[0].mxu0 %v711
    %v882 = vpop.f32.mrb[0].mxu0
    %v883 = vadd.f32 %v750, %v882
    %v884 = vpop.f32.mrb[0].mxu0
    %v885 = vpop.f32.mrb[0].mxu0
    %v886 = vpop.f32.mrb[0].mxu0
    %887 = vdwg.mxu0
    %888 = vst [vmem:[#allocation7] sm:$0x3] %v883
    // Predicated region
    $region30: #{backward_network_forward.1} parent=1 // pred_check
      _
    $region31: #{backward_network_forward.1} parent=1 // pred_check_branch
      %890 = sbr.rel (0) target = $region33
    $region32: #{backward_network_forward.1} parent=1 // pred_region
      %s892 = ssub.s32 32, 32
      %893 = vsyncadd [#allocation4], %s892
      %s895 = sshll.u32 [#allocation7], 4
      %s896 = int_to_ptr.vmem [resolvable:$true] %s895
      %898 = dma.vmem_to_hbm [thread:$0]  %s896, 32, %s5, [#allocation4]
    $region33: #{backward_network_forward.1} parent=1 // pred_fallthru
      _
    // Predicated region
    $region34: #{backward_network_forward.1} parent=1 // pred_check
      _
    $region35: #{backward_network_forward.1} parent=1 // pred_check_branch
      %900 = sbr.rel (0) target = $region37
    $region36: #{backward_network_forward.1} parent=1 // pred_region
      %901 = dma.done [#allocation4], 32
    $region37: #{backward_network_forward.1} parent=1 // pred_fallthru
      _
    %902 = vsyncpa [#allocation3], 1
    %903 = vsyncpa [#allocation6], 1
    %904 = vsyncpa [#allocation4], 1

</llo_original>
